<compile_context>
chip_gen: v5e
topology: v5e:2x2
jax: 0.10.0
libtpu: 0.0.40
codegen_flags: <defaults>
</compile_context>

<pallas_src>
import jax
import jax.numpy as jnp
from jax import lax
from jax.experimental import pallas as pl
from jax.experimental.pallas import tpu as pltpu


def mlp_kernel(x_ref, w1_ref, b1_ref, w2_ref, b2_ref, w3_ref, b3_ref, o_ref):
    x = x_ref[...]                                            # [tile_b, num_inputs]

    # layer 1: x @ W1^T + b1, ReLU   (W1 is [30, num_inputs], PyTorch layout)
    h1 = lax.dot_general(x, w1_ref[...], (((1,), (1,)), ((), ())),
                         preferred_element_type=jnp.float32) + b1_ref[...]
    h1 = jnp.maximum(h1, 0.0)                                 # [tile_b, 30]

    # layer 2: h1 @ W2^T + b2, ReLU  (W2 is [20, 30])
    h2 = lax.dot_general(h1, w2_ref[...], (((1,), (1,)), ((), ())),
                         preferred_element_type=jnp.float32) + b2_ref[...]
    h2 = jnp.maximum(h2, 0.0)                                 # [tile_b, 20]

    # layer 3, feature-major: W3 @ h2^T + b3  -> [num_outputs, tile_b]
    # (keeps the batch on the 128-lane axis => lane-dense, unmasked stores)
    o_ref[...] = lax.dot_general(w3_ref[...], h2, (((1,), (1,)), ((), ())),
                                 preferred_element_type=jnp.float32) + b3_ref[...]


def _round_up(n, m):
    return ((n + m - 1) // m) * m


def neural_network_forward(x, params, *, tile_b_max=512):
    """x: [B, num_inputs] float32. params: dict of (W, b) per layer with
    PyTorch Linear convention W: [out, in], b: [out]. Returns [B, num_outputs]."""
    (w1, b1), (w2, b2), (w3, b3) = params["l1"], params["l2"], params["l3"]
    B, num_inputs = x.shape
    h1_dim, h2_dim = w1.shape[0], w2.shape[0]
    num_outputs = w3.shape[0]

    # Batch tiling: tile must be a multiple of 8 (sublane); pad B to a multiple of it.
    tile_b = min(tile_b_max, _round_up(B, 8))
    b_pad = _round_up(B, tile_b)
    if b_pad != B:
        x = jnp.pad(x, ((0, b_pad - B), (0, 0)))
    num_tiles = b_pad // tile_b

    # Biases as 2-D (cheap metadata reshape, no HBM copy): row vectors for layers
    # 1/2, column vector for the feature-major final layer.
    args = (
        x,
        w1, b1.reshape(1, h1_dim),
        w2, b2.reshape(1, h2_dim),
        w3, b3.reshape(num_outputs, 1),
    )

    const = lambda i: (0, 0)  # weights / biases: same block every grid step (stay resident)
    out_t = pl.pallas_call(
        mlp_kernel,
        out_shape=jax.ShapeDtypeStruct((num_outputs, b_pad), jnp.float32),
        grid=(num_tiles,),
        in_specs=[
            pl.BlockSpec((tile_b, num_inputs), lambda i: (i, 0)),   # x tile
            pl.BlockSpec((h1_dim, num_inputs), const),              # W1
            pl.BlockSpec((1, h1_dim), const),                       # b1
            pl.BlockSpec((h2_dim, h1_dim), const),                  # W2
            pl.BlockSpec((1, h2_dim), const),                       # b2
            pl.BlockSpec((num_outputs, h2_dim), const),             # W3
            pl.BlockSpec((num_outputs, 1), const),                  # b3
        ],
        out_specs=pl.BlockSpec((num_outputs, tile_b), lambda i: (0, i)),
        compiler_params=pltpu.CompilerParams(
            dimension_semantics=("parallel",),
        ),
    )(*args)

    # Back to row-major [B, num_outputs]; drop padded rows.
    return out_t.T[:B]


def init_params(key, num_inputs, num_outputs):
    """Deterministic init matching torch.nn.Linear's U(-1/sqrt(fan_in), 1/sqrt(fan_in))."""
    dims = [(num_inputs, 30), (30, 20), (20, num_outputs)]
    params = {}
    for i, (fan_in, fan_out) in enumerate(dims, start=1):
        key, kw, kb = jax.random.split(key, 3)
        bound = 1.0 / jnp.sqrt(jnp.float32(fan_in))
        w = jax.random.uniform(kw, (fan_out, fan_in), jnp.float32, -bound, bound)
        b = jax.random.uniform(kb, (fan_out,), jnp.float32, -bound, bound)
        params[f"l{i}"] = (w, b)
    return params


def reference_forward(x, params):
    (w1, b1), (w2, b2), (w3, b3) = params["l1"], params["l2"], params["l3"]
    h1 = jnp.maximum(x @ w1.T + b1, 0.0)
    h2 = jnp.maximum(h1 @ w2.T + b2, 0.0)
    return h2 @ w3.T + b3


if __name__ == "__main__":
    num_inputs, num_outputs, batch = 50, 3, 8

    key = jax.random.PRNGKey(0)
    key, kx = jax.random.split(key)
    x = jax.random.normal(kx, (batch, num_inputs), jnp.float32)
    params = init_params(key, num_inputs, num_outputs)

    out = neural_network_forward(x, params)
    out = jax.block_until_ready(out)

    ref = reference_forward(x, params)
    assert out.shape == (batch, num_outputs)
    assert jnp.allclose(out, ref, atol=1e-5, rtol=1e-5), "mismatch vs reference"

    print("KERNEL_OK")
</pallas_src>

<mosaic_0001>
module attributes {stable_mosaic.version = 11 : i64} {
  func.func @mlp_kernel(%arg0: i32, %arg1: memref<8x50xf32, #tpu.memory_space<vmem>>, %arg2: memref<30x50xf32, #tpu.memory_space<vmem>>, %arg3: memref<1x30xf32, #tpu.memory_space<vmem>>, %arg4: memref<20x30xf32, #tpu.memory_space<vmem>>, %arg5: memref<1x20xf32, #tpu.memory_space<vmem>>, %arg6: memref<3x20xf32, #tpu.memory_space<vmem>>, %arg7: memref<3x1xf32, #tpu.memory_space<vmem>>, %arg8: memref<3x8xf32, #tpu.memory_space<vmem>>) attributes {dimension_semantics = [#tpu.dimension_semantics<parallel>], iteration_bounds = array<i64: 1>, scalar_prefetch = 0 : i64, scratch_operands = 0 : i64, tpu.core_type = #tpu.core_type<tc>, window_params = [{transform_indices = @transform_0, window_bounds = array<i64: 8, 50>}, {pipeline_mode = #tpu.pipeline_mode<synchronous>, transform_indices = @transform_1, window_bounds = array<i64: 30, 50>}, {pipeline_mode = #tpu.pipeline_mode<synchronous>, transform_indices = @transform_2, window_bounds = array<i64: 1, 30>}, {pipeline_mode = #tpu.pipeline_mode<synchronous>, transform_indices = @transform_3, window_bounds = array<i64: 20, 30>}, {pipeline_mode = #tpu.pipeline_mode<synchronous>, transform_indices = @transform_4, window_bounds = array<i64: 1, 20>}, {pipeline_mode = #tpu.pipeline_mode<synchronous>, transform_indices = @transform_5, window_bounds = array<i64: 3, 20>}, {pipeline_mode = #tpu.pipeline_mode<synchronous>, transform_indices = @transform_6, window_bounds = array<i64: 3, 1>}, {transform_indices = @transform_7, window_bounds = array<i64: 3, 8>}]} {
    %c0 = arith.constant 0 : index
    %c0_0 = arith.constant 0 : index
    %0 = vector.load %arg1[%c0, %c0_0] : memref<8x50xf32, #tpu.memory_space<vmem>>, vector<8x50xf32>
    %c0_1 = arith.constant 0 : index
    %c0_2 = arith.constant 0 : index
    %1 = vector.load %arg2[%c0_1, %c0_2] : memref<30x50xf32, #tpu.memory_space<vmem>>, vector<30x50xf32>
    %cst = arith.constant dense<0.000000e+00> : vector<8x30xf32>
    %2 = tpu.matmul %0, %1, %cst {dimension_numbers = #tpu.dot_dimension_numbers<[1], [1], [0], [0], [0, 0, 1, 0], [], []>} : vector<8x50xf32>, vector<30x50xf32>, vector<8x30xf32> -> vector<8x30xf32>
    %c0_3 = arith.constant 0 : index
    %c0_4 = arith.constant 0 : index
    %3 = vector.load %arg3[%c0_3, %c0_4] : memref<1x30xf32, #tpu.memory_space<vmem>>, vector<1x30xf32>
    %4 = vector.broadcast %3 : vector<1x30xf32> to vector<8x30xf32>
    %5 = arith.addf %2, %4 : vector<8x30xf32>
    %cst_5 = arith.constant 0.000000e+00 : f32
    %6 = vector.broadcast %cst_5 : f32 to vector<8x30xf32>
    %7 = arith.maximumf %5, %6 : vector<8x30xf32>
    %c0_6 = arith.constant 0 : index
    %c0_7 = arith.constant 0 : index
    %8 = vector.load %arg4[%c0_6, %c0_7] : memref<20x30xf32, #tpu.memory_space<vmem>>, vector<20x30xf32>
    %cst_8 = arith.constant dense<0.000000e+00> : vector<8x20xf32>
    %9 = tpu.matmul %7, %8, %cst_8 {dimension_numbers = #tpu.dot_dimension_numbers<[1], [1], [0], [0], [0, 0, 1, 0], [], []>} : vector<8x30xf32>, vector<20x30xf32>, vector<8x20xf32> -> vector<8x20xf32>
    %c0_9 = arith.constant 0 : index
    %c0_10 = arith.constant 0 : index
    %10 = vector.load %arg5[%c0_9, %c0_10] : memref<1x20xf32, #tpu.memory_space<vmem>>, vector<1x20xf32>
    %11 = vector.broadcast %10 : vector<1x20xf32> to vector<8x20xf32>
    %12 = arith.addf %9, %11 : vector<8x20xf32>
    %cst_11 = arith.constant 0.000000e+00 : f32
    %13 = vector.broadcast %cst_11 : f32 to vector<8x20xf32>
    %14 = arith.maximumf %12, %13 : vector<8x20xf32>
    %c0_12 = arith.constant 0 : index
    %c0_13 = arith.constant 0 : index
    %15 = vector.load %arg6[%c0_12, %c0_13] : memref<3x20xf32, #tpu.memory_space<vmem>>, vector<3x20xf32>
    %cst_14 = arith.constant dense<0.000000e+00> : vector<3x8xf32>
    %16 = tpu.matmul %15, %14, %cst_14 {dimension_numbers = #tpu.dot_dimension_numbers<[1], [1], [0], [0], [0, 0, 1, 0], [], []>} : vector<3x20xf32>, vector<8x20xf32>, vector<3x8xf32> -> vector<3x8xf32>
    %c0_15 = arith.constant 0 : index
    %c0_16 = arith.constant 0 : index
    %17 = vector.load %arg7[%c0_15, %c0_16] : memref<3x1xf32, #tpu.memory_space<vmem>>, vector<3x1xf32>
    %18 = vector.broadcast %17 : vector<3x1xf32> to vector<3x8xf32>
    %19 = arith.addf %16, %18 : vector<3x8xf32>
    %c0_17 = arith.constant 0 : index
    %c0_18 = arith.constant 0 : index
    %20 = vector.load %arg8[%c0_17, %c0_18] : memref<3x8xf32, #tpu.memory_space<vmem>>, vector<3x8xf32>
    tpu.vector_store %arg8[%c0_17, %c0_18], %19 {strides = array<i32>} : memref<3x8xf32, #tpu.memory_space<vmem>>, vector<3x8xf32>,
    return
  }
  func.func @transform_0(%arg0: i32) -> (i32, i32) {
    %c0_i32 = arith.constant 0 : i32
    %c0_i32_0 = arith.constant 0 : i32
    return %arg0, %c0_i32 : i32, i32
  }
  func.func @transform_1(%arg0: i32) -> (i32, i32) {
    %c0_i32 = arith.constant 0 : i32
    %c0_i32_0 = arith.constant 0 : i32
    %c0_i32_1 = arith.constant 0 : i32
    return %c0_i32, %c0_i32_0 : i32, i32
  }
  func.func @transform_2(%arg0: i32) -> (i32, i32) {
    %c0_i32 = arith.constant 0 : i32
    %c0_i32_0 = arith.constant 0 : i32
    %c0_i32_1 = arith.constant 0 : i32
    return %c0_i32, %c0_i32_0 : i32, i32
  }
  func.func @transform_3(%arg0: i32) -> (i32, i32) {
    %c0_i32 = arith.constant 0 : i32
    %c0_i32_0 = arith.constant 0 : i32
    %c0_i32_1 = arith.constant 0 : i32
    return %c0_i32, %c0_i32_0 : i32, i32
  }
  func.func @transform_4(%arg0: i32) -> (i32, i32) {
    %c0_i32 = arith.constant 0 : i32
    %c0_i32_0 = arith.constant 0 : i32
    %c0_i32_1 = arith.constant 0 : i32
    return %c0_i32, %c0_i32_0 : i32, i32
  }
  func.func @transform_5(%arg0: i32) -> (i32, i32) {
    %c0_i32 = arith.constant 0 : i32
    %c0_i32_0 = arith.constant 0 : i32
    %c0_i32_1 = arith.constant 0 : i32
    return %c0_i32, %c0_i32_0 : i32, i32
  }
  func.func @transform_6(%arg0: i32) -> (i32, i32) {
    %c0_i32 = arith.constant 0 : i32
    %c0_i32_0 = arith.constant 0 : i32
    %c0_i32_1 = arith.constant 0 : i32
    return %c0_i32, %c0_i32_0 : i32, i32
  }
  func.func @transform_7(%arg0: i32) -> (i32, i32) {
    %c0_i32 = arith.constant 0 : i32
    %c0_i32_0 = arith.constant 0 : i32
    return %c0_i32, %arg0 : i32, i32
  }
}

</mosaic_0001>

<llo_original>
// kernel: tpu_custom_call.1
$region0: #{tpu_custom_call.1}
  #allocation0 [shape = 'u32[]', space=smem, size = 0x4, offset = 0x4, fixed_abs, tag = 'smem constant byte address 0x4 - core index']
  #allocation1 [shape = 'u32[72,128]{1,0:T(1,128)}', space=vmem, size = 0x9000, scoped, tag = 'internal scratch']
  %s0 = inlined_call_operand.hbm [shape: f32[8,50], index: 0, kind: input, shape index: {}]
  %s1 = inlined_call_operand.hbm [shape: f32[30,50], index: 1, kind: input, shape index: {}]
  %s2 = inlined_call_operand.vmem [shape: f32[1,30], index: 2, kind: input, shape index: {}]
  %s3 = inlined_call_operand.hbm [shape: f32[20,30], index: 3, kind: input, shape index: {}]
  %s4 = inlined_call_operand.vmem [shape: f32[1,20], index: 4, kind: input, shape index: {}]
  %s5 = inlined_call_operand.vmem [shape: f32[3,20], index: 5, kind: input, shape index: {}]
  %s6 = inlined_call_operand.vmem [shape: f32[3,1], index: 6, kind: input, shape index: {}]
  %s7 = inlined_call_operand.hbm [shape: f32[3,8], index: 7, kind: output, shape index: {}]
  %s8 = sld [smem:[#allocation0]]
  $region50: #{tpu_custom_call.1} parent=0
    _
  %s10 = ssub.s32 1, %s8
  %s11 = scalar_select 0, %s10, %s8
  $region1: #{tpu_custom_call.1} parent=0
    #allocation2 [shape = 'u8[4096]{0}', space=vmem, size = 0x1000, scoped, tag = 'input window, operand 0, single buffered']
    #allocation3 [shape = 's32[1]{0}', space=sflag, size = 0x4, scoped, tag = 'scoped memory for tpu_custom_call.1']
    #allocation4 [shape = 's32[1]{0}', space=sflag, size = 0x4, scoped, tag = 'scoped memory for tpu_custom_call.1']
    #allocation5 [shape = 'u8[16384]{0}', space=vmem, size = 0x4000, scoped, tag = 'input window, operand 1, single buffered']
    #allocation6 [shape = 's32[1]{0}', space=sflag, size = 0x4, scoped, tag = 'scoped memory for tpu_custom_call.1']
    #allocation7 [shape = 'u8[12288]{0}', space=vmem, size = 0x3000, scoped, tag = 'input window, operand 3, single buffered']
    #allocation8 [shape = 'u8[2048]{0}', space=vmem, size = 0x800, scoped, tag = 'output window, operand 0, single buffered']
    %12 = vsyncpa [#allocation3], 0
    %13 = vsyncpa [#allocation6], 0
    %14 = vsyncpa [#allocation4], 0
    // Predicated region
    $region2: #{tpu_custom_call.1} parent=1 // pred_check
      _
    $region3: #{tpu_custom_call.1} parent=1 // pred_check_branch
      %16 = sbr.rel (0) target = $region5
    $region4: #{tpu_custom_call.1} parent=1 // pred_region
      %18 = vsyncadd [#allocation3], 0
      %s20 = sshll.u32 %s0, 4
      %s21 = int_to_ptr.hbm [resolvable:$true] %s20
      %s22 = sshll.u32 [#allocation2], 4
      %s23 = int_to_ptr.vmem [resolvable:$true] %s22
      %25 = dma.hbm_to_vmem [thread:$0]  %s21, 128, %s23, [#allocation3]
    $region5: #{tpu_custom_call.1} parent=1 // pred_fallthru
      _
    // Predicated region
    $region6: #{tpu_custom_call.1} parent=1 // pred_check
      _
    $region7: #{tpu_custom_call.1} parent=1 // pred_check_branch
      %27 = sbr.rel (0) target = $region9
    $region8: #{tpu_custom_call.1} parent=1 // pred_region
      %29 = vsyncadd [#allocation6], 0
      %s30 = sshll.u32 %s1, 4
      %s31 = int_to_ptr.hbm [resolvable:$true] %s30
      %s32 = sshll.u32 [#allocation5], 4
      %s33 = int_to_ptr.vmem [resolvable:$true] %s32
      %38 = dma.hbm_to_vmem [thread:$0]  %s31, 512, %s33, [#allocation6], 128, 128, 8
    $region9: #{tpu_custom_call.1} parent=1 // pred_fallthru
      _
    // Predicated region
    $region10: #{tpu_custom_call.1} parent=1 // pred_check
      _
    $region11: #{tpu_custom_call.1} parent=1 // pred_check_branch
      %40 = sbr.rel (0) target = $region13
    $region12: #{tpu_custom_call.1} parent=1 // pred_region
      _
    $region13: #{tpu_custom_call.1} parent=1 // pred_fallthru
      _
    // Predicated region
    $region14: #{tpu_custom_call.1} parent=1 // pred_check
      _
    $region15: #{tpu_custom_call.1} parent=1 // pred_check_branch
      %42 = sbr.rel (0) target = $region17
    $region16: #{tpu_custom_call.1} parent=1 // pred_region
      %44 = vsyncadd [#allocation6], 0
      %s45 = sshll.u32 %s3, 4
      %s46 = int_to_ptr.hbm [resolvable:$true] %s45
      %s47 = sshll.u32 [#allocation7], 4
      %s48 = int_to_ptr.vmem [resolvable:$true] %s47
      %53 = dma.hbm_to_vmem [thread:$0]  %s46, 384, %s48, [#allocation6], 128, 128, 8
    $region17: #{tpu_custom_call.1} parent=1 // pred_fallthru
      _
    // Predicated region
    $region18: #{tpu_custom_call.1} parent=1 // pred_check
      _
    $region19: #{tpu_custom_call.1} parent=1 // pred_check_branch
      %55 = sbr.rel (0) target = $region21
    $region20: #{tpu_custom_call.1} parent=1 // pred_region
      _
    $region21: #{tpu_custom_call.1} parent=1 // pred_fallthru
      _
    // Predicated region
    $region22: #{tpu_custom_call.1} parent=1 // pred_check
      _
    $region23: #{tpu_custom_call.1} parent=1 // pred_check_branch
      %57 = sbr.rel (0) target = $region25
    $region24: #{tpu_custom_call.1} parent=1 // pred_region
      _
    $region25: #{tpu_custom_call.1} parent=1 // pred_fallthru
      _
    // Predicated region
    $region26: #{tpu_custom_call.1} parent=1 // pred_check
      _
    $region27: #{tpu_custom_call.1} parent=1 // pred_check_branch
      %59 = sbr.rel (0) target = $region29
    $region28: #{tpu_custom_call.1} parent=1 // pred_region
      _
    $region29: #{tpu_custom_call.1} parent=1 // pred_fallthru
      _
    // Predicated region
    $region30: #{tpu_custom_call.1} parent=1 // pred_check
      _
    $region31: #{tpu_custom_call.1} parent=1 // pred_check_branch
      %61 = sbr.rel (0) target = $region33
    $region32: #{tpu_custom_call.1} parent=1 // pred_region
      %63 = dma.done [#allocation3], 128
    $region33: #{tpu_custom_call.1} parent=1 // pred_fallthru
      _
    // Predicated region
    $region34: #{tpu_custom_call.1} parent=1 // pred_check
      _
    $region35: #{tpu_custom_call.1} parent=1 // pred_check_branch
      %65 = sbr.rel (0) target = $region37
    $region36: #{tpu_custom_call.1} parent=1 // pred_region
      %67 = dma.done [#allocation6], 512
    $region37: #{tpu_custom_call.1} parent=1 // pred_fallthru
      _
    // Predicated region
    $region38: #{tpu_custom_call.1} parent=1 // pred_check
      _
    $region39: #{tpu_custom_call.1} parent=1 // pred_check_branch
      %69 = sbr.rel (0) target = $region41
    $region40: #{tpu_custom_call.1} parent=1 // pred_region
      %71 = dma.done [#allocation6], 384
    $region41: #{tpu_custom_call.1} parent=1 // pred_fallthru
      _
    %v72 = vld [vmem:[#allocation2] sm:$0xff]
    %v73 = vld [vmem:[#allocation5] sm:$0xff]
    %v74 = vld [vmem:[#allocation5 + $0x8] sm:$0xff]
    %v75 = vld [vmem:[#allocation5 + $0x10] sm:$0xff]
    %v76 = vld [vmem:[#allocation5 + $0x18] sm:$0x3f]
    %v77 = vld [vmem:[%s2] sm:$0x1]
    %v79 = vperm.slane %v77, 0
    %vm81 = vcmask 408576
    %v83 = vsel %vm81, %v72, 0
    %v86 = vsel %vm81, %v73, 0
    %v89 = vsel %vm81, %v74, 0
    %v92 = vsel %vm81, %v75, 0
    %v95 = vsel %vm81, %v76, 0
    %97 = vmatpush.xpose.msra.mxu0 0.0
    %98 = vmatpush.xpose.msra.mxu0 0.0
    %99 = vmatpush.xpose.msra.mxu0 0.0
    %100 = vmatpush.xpose.msra.mxu0 0.0
    %101 = vmatpush.xpose.msra.mxu0 0.0
    %102 = vmatpush.xpose.msra.mxu0 0.0
    %103 = vmatpush.xpose.msra.mxu0 0.0
    %104 = vmatpush.xpose.msra.mxu0 0.0
    %105 = vmatpush.xpose.msra.mxu0 0.0
    %106 = vmatpush.xpose.msra.mxu0 0.0
    %107 = vmatpush.xpose.msra.mxu0 0.0
    %108 = vmatpush.xpose.msra.mxu0 0.0
    %109 = vmatpush.xpose.msra.mxu0 %v95
    %110 = vmatpush.xpose.msra.mxu0 %v92
    %111 = vmatpush.xpose.msra.mxu0 %v89
    %112 = vmatpush.xpose.msra.mxu0 %v86
    %113 = vmatmul.f32.gmra.mxu0 %v83
    %v114 = vpop.f32.mrf.mxu0
    %v115 = vadd.f32 %v79, %v114
    %116 = vdwg.mxu0
    %v117 = vmax.f32 %v115, 0.0
    %v118 = vld [vmem:[#allocation7] sm:$0xff]
    %v119 = vld [vmem:[#allocation7 + $0x8] sm:$0xff]
    %v120 = vld [vmem:[#allocation7 + $0x10] sm:$0xf]
    %v121 = vld [vmem:[%s4] sm:$0x1]
    %v123 = vperm.slane %v121, 0
    %vm125 = vcmask 244736
    %v127 = vsel %vm125, %v117, 0
    %v130 = vsel %vm125, %v118, 0
    %v133 = vsel %vm125, %v119, 0
    %v136 = vsel %vm125, %v120, 0
    %138 = vmatpush.xpose.msra.mxu0 0.0
    %139 = vmatpush.xpose.msra.mxu0 0.0
    %140 = vmatpush.xpose.msra.mxu0 0.0
    %141 = vmatpush.xpose.msra.mxu0 0.0
    %142 = vmatpush.xpose.msra.mxu0 0.0
    %143 = vmatpush.xpose.msra.mxu0 0.0
    %144 = vmatpush.xpose.msra.mxu0 0.0
    %145 = vmatpush.xpose.msra.mxu0 0.0
    %146 = vmatpush.xpose.msra.mxu0 0.0
    %147 = vmatpush.xpose.msra.mxu0 0.0
    %148 = vmatpush.xpose.msra.mxu0 0.0
    %149 = vmatpush.xpose.msra.mxu0 0.0
    %150 = vmatpush.xpose.msra.mxu0 0.0
    %151 = vmatpush.xpose.msra.mxu0 %v136
    %152 = vmatpush.xpose.msra.mxu0 %v133
    %153 = vmatpush.xpose.msra.mxu0 %v130
    %154 = vmatmul.f32.gmra.mxu0 %v127
    %v155 = vpop.f32.mrf.mxu0
    %v156 = vadd.f32 %v123, %v155
    %157 = vdwg.mxu0
    %v158 = vmax.f32 %v156, 0.0
    %v159 = vld [vmem:[%s5] sm:$0x7]
    %v160 = vld [vmem:[%s6] sm:$0x7]
    %162 = vset.pattern.permute.xlu0 0
    %163 = vperm.xlu0 %162, %v160
    %v164 = vpop.permute.xlu0 %163
    %vm166 = vcmask 162816
    %v168 = vsel %vm166, %v159, 0
    %v171 = vsel %vm166, %v158, 0
    %173 = vmatpush.xpose.msra.mxu0 0.0
    %174 = vmatpush.xpose.msra.mxu0 0.0
    %175 = vmatpush.xpose.msra.mxu0 0.0
    %176 = vmatpush.xpose.msra.mxu0 0.0
    %177 = vmatpush.xpose.msra.mxu0 0.0
    %178 = vmatpush.xpose.msra.mxu0 0.0
    %179 = vmatpush.xpose.msra.mxu0 0.0
    %180 = vmatpush.xpose.msra.mxu0 0.0
    %181 = vmatpush.xpose.msra.mxu0 0.0
    %182 = vmatpush.xpose.msra.mxu0 0.0
    %183 = vmatpush.xpose.msra.mxu0 0.0
    %184 = vmatpush.xpose.msra.mxu0 0.0
    %185 = vmatpush.xpose.msra.mxu0 0.0
    %186 = vmatpush.xpose.msra.mxu0 0.0
    %187 = vmatpush.xpose.msra.mxu0 0.0
    %188 = vmatpush.xpose.msra.mxu0 %v171
    %189 = vmatmul.f32.gmra.mxu0 %v168
    %v190 = vpop.f32.mrf.mxu0
    %v191 = vadd.f32 %v164, %v190
    %192 = vdwg.mxu0
    %vm193 = vcmask 59392
    %194 = vst.msk [vmem:[#allocation8] sm:$0x7] %vm193, %v191
    // Predicated region
    $region42: #{tpu_custom_call.1} parent=1 // pred_check
      _
    $region43: #{tpu_custom_call.1} parent=1 // pred_check_branch
      %196 = sbr.rel (0) target = $region45
    $region44: #{tpu_custom_call.1} parent=1 // pred_region
      %198 = vsyncadd [#allocation4], 0
      %s200 = sshll.u32 [#allocation8], 4
      %s201 = int_to_ptr.vmem [resolvable:$true] %s200
      %s202 = sshll.u32 %s7, 4
      %s203 = int_to_ptr.hbm [resolvable:$true] %s202
      %205 = dma.vmem_to_hbm [thread:$0]  %s201, 64, %s203, [#allocation4]
    $region45: #{tpu_custom_call.1} parent=1 // pred_fallthru
      _
    // Predicated region
    $region46: #{tpu_custom_call.1} parent=1 // pred_check
      _
    $region47: #{tpu_custom_call.1} parent=1 // pred_check_branch
      %207 = sbr.rel (0) target = $region49
    $region48: #{tpu_custom_call.1} parent=1 // pred_region
      %209 = dma.done [#allocation4], 64
    $region49: #{tpu_custom_call.1} parent=1 // pred_fallthru
      _
    %210 = vsyncpa [#allocation3], 1
    %211 = vsyncpa [#allocation6], 1
    %212 = vsyncpa [#allocation4], 1

</llo_original>
